<compile_context>
chip_gen: v7x
topology: tpu7x:2x2x1
jax: 0.10.0
libtpu: 0.0.40
codegen_flags: <defaults>
</compile_context>

<pallas_src>
import functools
import math

import jax
import jax.numpy as jnp
import numpy as np
from jax.experimental import pallas as pl
from jax.experimental.pallas import tpu as pltpu


def _northity_kernel(x_ref, *refs, scale, eps, one_hot):
    # x_ref: (tm, C) lane-dense tile; selector refs: (C, cg) 0/1 constants.
    if one_hot:
        dsel_ref, ssel_ref, o_ref = refs
    else:
        ssel_ref, o_ref = refs
        dsel_ref = ssel_ref                               # dot sel == square sel
    x = x_ref[...].astype(jnp.float32)                    # single upcast; DMA-bound op
    # Group reductions on the MXU via block-diagonal 0/1 selectors (exact in
    # every MXU pass scheme since the selector values are exactly representable).
    dot = jnp.dot(x, dsel_ref[...], preferred_element_type=jnp.float32)      # (tm, cg)
    xsq = jnp.dot(x * x, ssel_ref[...], preferred_element_type=jnp.float32)  # (tm, cg)
    # 1 / max(||needle||, eps) == rsqrt(max(||needle||^2, eps^2)); EUP slot.
    inv = jax.lax.rsqrt(jnp.maximum(xsq, eps * eps))
    o_ref[...] = (dot * (inv * scale)).astype(o_ref.dtype)


def _largest_divisor_le(n, cap):
    best = 1
    for d in range(1, min(int(cap), int(n)) + 1):
        if n % d == 0:
            best = d
    return best


def northity_pallas(x, radius=0.5, axis_dim=None, one_hot=False, eps=1e-8):
    if axis_dim is None:
        axis_dim = x.shape[-1]
    a = int(axis_dim)
    L = x.shape[-1]
    assert L % a == 0, "last dim must be divisible by axis_dim"
    G = L // a
    lead = x.shape[:-1]
    M = int(np.prod(lead)) if lead else 1
    NG = M * G                                            # total groups in flat stream

    # ---- fold the flat group stream into a lane-dense (R, C) matrix ----
    # cg groups per folded row, C = cg*a lanes.  cg capped so MXU redundancy
    # (2 matmuls x cg MACs per element) stays well under the HBM roofline on
    # every chip, and cg | NG so the reshape is free (no pad / slice copies).
    cg_cap = max(32, 128 // max(a, 1))
    cg = _largest_divisor_le(NG, cg_cap)
    if cg < G and cg * a < 128:
        cg = G                                            # fallback: original row layout
    R = NG // cg
    C = cg * a
    xr = jnp.reshape(x, (R, C))                           # metadata-only reshape

    # ---- constant (C, cg) selector matrices (host-side, tiny) ----
    elem_group = np.arange(C) // a
    ssel = (elem_group[:, None] == np.arange(cg)[None, :]).astype(np.float32)
    if one_hot:
        is_last = ((np.arange(C) % a) == (a - 1)).astype(np.float32)
        dsel = ssel * is_last[:, None]
        north_norm = 1.0
    else:
        dsel = None
        north_norm = math.sqrt(a)
    scale = float(radius) / max(north_norm, float(eps))   # radius / max(||north||, eps)

    # ---- row tiling: budget the real VMEM working set ----
    in_isz = jnp.dtype(x.dtype).itemsize
    out_isz = in_isz
    n_sel = 2 if one_hot else 1
    sel_bytes = n_sel * 2 * C * cg * 4                    # double-buffered constants
    # per-row: 2x buffered input + f32 upcast + f32 x*x temps + buffered output
    # + small f32 intermediates (dot, xsq, inv).
    bytes_per_row = C * (2 * in_isz + 2 * 4) + cg * (2 * out_isz + 3 * 4)
    budget = 32 * 1024 * 1024 - sel_bytes
    tm = max(8, (budget // bytes_per_row) // 8 * 8)
    if R > 8:
        # keep at least 2 (balanced) grid tiles so v7x megacore shards the rows
        half = max(8, ((-(-R // 2)) + 7) // 8 * 8)
        tm = min(tm, half)
    if tm >= R:
        tm = R                                            # single full-extent block
    num_tiles = -(-R // tm)                               # cdiv; ragged last block ok

    kernel = functools.partial(_northity_kernel, scale=scale, eps=float(eps),
                               one_hot=bool(one_hot))

    operands = [xr]
    in_specs = [pl.BlockSpec((tm, C), lambda i: (i, 0))]  # lane-dense input tile
    if one_hot:
        operands.append(jnp.asarray(dsel))
        in_specs.append(pl.BlockSpec((C, cg), lambda i: (0, 0)))
    operands.append(jnp.asarray(ssel))
    in_specs.append(pl.BlockSpec((C, cg), lambda i: (0, 0)))

    out = pl.pallas_call(
        kernel,
        out_shape=jax.ShapeDtypeStruct((R, cg), x.dtype),
        grid=(num_tiles,),
        in_specs=in_specs,
        out_specs=pl.BlockSpec((tm, cg), lambda i: (i, 0)),
        compiler_params=pltpu.CompilerParams(
            dimension_semantics=("parallel",),
            vmem_limit_bytes=48 * 1024 * 1024,
        ),
    )(*operands)

    # (R, cg) flattened row-major is exactly the flat group order.
    return jnp.reshape(out, (*lead, G))


def _northity_ref(x, radius=0.5, axis_dim=None, one_hot=False, eps=1e-8):
    # pure-JAX reference (modern PyTorch eps semantics: per-norm clamp)
    if axis_dim is None:
        axis_dim = x.shape[-1]
    G = x.shape[-1] // axis_dim
    needle = jnp.reshape(x, (*x.shape[:-1], G, axis_dim)).astype(jnp.float32)
    if one_hot:
        north = jax.nn.one_hot(axis_dim - 1, axis_dim, dtype=jnp.float32)
    else:
        north = jnp.ones((axis_dim,), jnp.float32)
    w12 = jnp.sum(needle * north, axis=-1)
    n1 = jnp.maximum(jnp.sqrt(jnp.sum(needle * needle, axis=-1)), eps)
    n2 = jnp.maximum(jnp.sqrt(jnp.sum(north * north)), eps)
    return (w12 / (n1 * n2) * radius).astype(x.dtype)


if __name__ == "__main__":
    k1, k2 = jax.random.split(jax.random.PRNGKey(0))
    radius, axis_dim = 0.5, 8

    # small input consistent with the module: last dim 32, axis_dim 8
    x = jax.random.normal(k1, (2, 8, 32), dtype=jnp.float32)

    # default (north = ones) variant
    out = jax.block_until_ready(
        northity_pallas(x, radius=radius, axis_dim=axis_dim, one_hot=False))
    ref = _northity_ref(x, radius=radius, axis_dim=axis_dim, one_hot=False)
    assert out.shape == (2, 8, 4), out.shape
    assert out.dtype == x.dtype
    assert jnp.allclose(out, ref, atol=1e-5, rtol=1e-5)

    # one_hot variant
    out_oh = jax.block_until_ready(
        northity_pallas(x, radius=radius, axis_dim=axis_dim, one_hot=True))
    ref_oh = _northity_ref(x, radius=radius, axis_dim=axis_dim, one_hot=True)
    assert jnp.allclose(out_oh, ref_oh, atol=1e-5, rtol=1e-5)

    # bf16 input -> bf16 output (dtype preserved)
    xb = x.astype(jnp.bfloat16)
    out_b = jax.block_until_ready(
        northity_pallas(xb, radius=radius, axis_dim=axis_dim, one_hot=False))
    ref_b = _northity_ref(xb, radius=radius, axis_dim=axis_dim, one_hot=False)
    assert out_b.dtype == jnp.bfloat16
    assert jnp.allclose(out_b.astype(jnp.float32), ref_b.astype(jnp.float32),
                        atol=1e-2, rtol=1e-2)

    # multi-tile + ragged-grid path (R not a multiple of the row tile)
    x2 = jax.random.normal(k2, (6, 100, 64), dtype=jnp.float32)
    out2 = jax.block_until_ready(
        northity_pallas(x2, radius=radius, axis_dim=axis_dim, one_hot=False))
    ref2 = _northity_ref(x2, radius=radius, axis_dim=axis_dim, one_hot=False)
    assert out2.shape == (6, 100, 8)
    assert jnp.allclose(out2, ref2, atol=1e-5, rtol=1e-5)

    print("KERNEL_OK")
</pallas_src>

<mosaic_0001>
module attributes {stable_mosaic.version = 11 : i64} {
  func.func @_northity_kernel(%arg0: i32, %arg1: memref<2x256xf32, #tpu.memory_space<vmem>>, %arg2: memref<256x32xf32, #tpu.memory_space<vmem>>, %arg3: memref<2x32xf32, #tpu.memory_space<vmem>>) attributes {dimension_semantics = [#tpu.dimension_semantics<parallel>], iteration_bounds = array<i64: 1>, scalar_prefetch = 0 : i64, scratch_operands = 0 : i64, tpu.core_type = #tpu.core_type<tc>, window_params = [{transform_indices = @transform_0, window_bounds = array<i64: 2, 256>}, {pipeline_mode = #tpu.pipeline_mode<synchronous>, transform_indices = @transform_1, window_bounds = array<i64: 256, 32>}, {transform_indices = @transform_2, window_bounds = array<i64: 2, 32>}]} {
    %c0 = arith.constant 0 : index
    %c0_0 = arith.constant 0 : index
    %0 = vector.load %arg1[%c0, %c0_0] : memref<2x256xf32, #tpu.memory_space<vmem>>, vector<2x256xf32>
    %c0_1 = arith.constant 0 : index
    %c0_2 = arith.constant 0 : index
    %1 = vector.load %arg2[%c0_1, %c0_2] : memref<256x32xf32, #tpu.memory_space<vmem>>, vector<256x32xf32>
    %cst = arith.constant dense<0.000000e+00> : vector<2x32xf32>
    %2 = tpu.matmul %0, %1, %cst {dimension_numbers = #tpu.dot_dimension_numbers<[1], [0], [0], [1], [0, 0, 1, 1], [], []>} : vector<2x256xf32>, vector<256x32xf32>, vector<2x32xf32> -> vector<2x32xf32>
    %3 = arith.mulf %0, %0 : vector<2x256xf32>
    %c0_3 = arith.constant 0 : index
    %c0_4 = arith.constant 0 : index
    %4 = vector.load %arg2[%c0_3, %c0_4] : memref<256x32xf32, #tpu.memory_space<vmem>>, vector<256x32xf32>
    %cst_5 = arith.constant dense<0.000000e+00> : vector<2x32xf32>
    %5 = tpu.matmul %3, %4, %cst_5 {dimension_numbers = #tpu.dot_dimension_numbers<[1], [0], [0], [1], [0, 0, 1, 1], [], []>} : vector<2x256xf32>, vector<256x32xf32>, vector<2x32xf32> -> vector<2x32xf32>
    %cst_6 = arith.constant 1.000000e-16 : f32
    %6 = vector.broadcast %cst_6 : f32 to vector<2x32xf32>
    %7 = arith.maximumf %5, %6 : vector<2x32xf32>
    %8 = math.rsqrt %7 : vector<2x32xf32>
    %cst_7 = arith.constant 0.176776692 : f32
    %9 = vector.broadcast %cst_7 : f32 to vector<2x32xf32>
    %10 = arith.mulf %8, %9 : vector<2x32xf32>
    %11 = arith.mulf %2, %10 : vector<2x32xf32>
    %c0_8 = arith.constant 0 : index
    %c0_9 = arith.constant 0 : index
    %12 = vector.load %arg3[%c0_8, %c0_9] : memref<2x32xf32, #tpu.memory_space<vmem>>, vector<2x32xf32>
    tpu.vector_store %arg3[%c0_8, %c0_9], %11 {strides = array<i32>} : memref<2x32xf32, #tpu.memory_space<vmem>>, vector<2x32xf32>,
    return
  }
  func.func @transform_0(%arg0: i32) -> (i32, i32) {
    %c0_i32 = arith.constant 0 : i32
    %c0_i32_0 = arith.constant 0 : i32
    return %arg0, %c0_i32 : i32, i32
  }
  func.func @transform_1(%arg0: i32) -> (i32, i32) {
    %c0_i32 = arith.constant 0 : i32
    %c0_i32_0 = arith.constant 0 : i32
    %c0_i32_1 = arith.constant 0 : i32
    return %c0_i32, %c0_i32_0 : i32, i32
  }
  func.func @transform_2(%arg0: i32) -> (i32, i32) {
    %c0_i32 = arith.constant 0 : i32
    %c0_i32_0 = arith.constant 0 : i32
    return %arg0, %c0_i32 : i32, i32
  }
}

</mosaic_0001>

<llo_original>
// kernel: tpu_custom_call.1
$region0: #{tpu_custom_call.1}
  #allocation0 [shape = 'u32[]', space=smem, size = 0x4, offset = 0x4, fixed_abs, tag = 'smem constant byte address 0x4 - core index']
  #allocation1 [shape = 'u32[144,128]{1,0:T(1,128)}', space=vmem, size = 0x12000, scoped, tag = 'internal scratch']
  %s0 = inlined_call_operand.vmem [shape: f32[2,256], index: 0, kind: input, shape index: {}]
  %s1 = inlined_call_operand.vmem [shape: f32[256,32], index: 1, kind: input, shape index: {}]
  %s2 = inlined_call_operand.hbm [shape: f32[2,32], index: 2, kind: output, shape index: {}]
  %s3 = sld [smem:[#allocation0]]
  $region18: #{tpu_custom_call.1} parent=0
    _
  %s5 = ssub.s32 1, %s3
  %s6 = scalar_select 0, %s5, %s3
  $region1: #{tpu_custom_call.1} parent=0
    #allocation2 [shape = 'u8[1024]{0}', space=vmem, size = 0x400, scoped, tag = 'output window, operand 0, single buffered']
    #allocation3 [shape = 's32[1]{0}', space=sflag, size = 0x4, scoped, tag = 'scoped memory for tpu_custom_call.1']
    %7 = vsyncpa [#allocation3], 0
    // Predicated region
    $region2: #{tpu_custom_call.1} parent=1 // pred_check
      _
    $region3: #{tpu_custom_call.1} parent=1 // pred_check_branch
      %9 = sbr.rel (0) target = $region5
    $region4: #{tpu_custom_call.1} parent=1 // pred_region
      _
    $region5: #{tpu_custom_call.1} parent=1 // pred_fallthru
      _
    // Predicated region
    $region6: #{tpu_custom_call.1} parent=1 // pred_check
      _
    $region7: #{tpu_custom_call.1} parent=1 // pred_check_branch
      %11 = sbr.rel (0) target = $region9
    $region8: #{tpu_custom_call.1} parent=1 // pred_region
      _
    $region9: #{tpu_custom_call.1} parent=1 // pred_fallthru
      _
    %v12 = vld [vmem:[%s0] sm:$0xf]
    %v13 = vld [vmem:[%s1] sm:$0xff]
    %v14 = vld [vmem:[%s1 + $0x8] sm:$0xff]
    %v15 = vld [vmem:[%s1 + $0x10] sm:$0xff]
    %v16 = vld [vmem:[%s1 + $0x18] sm:$0xff]
    %v17 = vld [vmem:[%s1 + $0x20] sm:$0xff]
    %v18 = vld [vmem:[%s1 + $0x28] sm:$0xff]
    %v19 = vld [vmem:[%s1 + $0x30] sm:$0xff]
    %v20 = vld [vmem:[%s1 + $0x38] sm:$0xff]
    %v21 = vld [vmem:[%s1 + $0x40] sm:$0xff]
    %v22 = vld [vmem:[%s1 + $0x48] sm:$0xff]
    %v23 = vld [vmem:[%s1 + $0x50] sm:$0xff]
    %v24 = vld [vmem:[%s1 + $0x58] sm:$0xff]
    %v25 = vld [vmem:[%s1 + $0x60] sm:$0xff]
    %v26 = vld [vmem:[%s1 + $0x68] sm:$0xff]
    %v27 = vld [vmem:[%s1 + $0x70] sm:$0xff]
    %v28 = vld [vmem:[%s1 + $0x78] sm:$0xff]
    %v29 = vld [vmem:[%s1 + $0x80] sm:$0xff]
    %v30 = vld [vmem:[%s1 + $0x88] sm:$0xff]
    %v31 = vld [vmem:[%s1 + $0x90] sm:$0xff]
    %v32 = vld [vmem:[%s1 + $0x98] sm:$0xff]
    %v33 = vld [vmem:[%s1 + $0xa0] sm:$0xff]
    %v34 = vld [vmem:[%s1 + $0xa8] sm:$0xff]
    %v35 = vld [vmem:[%s1 + $0xb0] sm:$0xff]
    %v36 = vld [vmem:[%s1 + $0xb8] sm:$0xff]
    %v37 = vld [vmem:[%s1 + $0xc0] sm:$0xff]
    %v38 = vld [vmem:[%s1 + $0xc8] sm:$0xff]
    %v39 = vld [vmem:[%s1 + $0xd0] sm:$0xff]
    %v40 = vld [vmem:[%s1 + $0xd8] sm:$0xff]
    %v41 = vld [vmem:[%s1 + $0xe0] sm:$0xff]
    %v42 = vld [vmem:[%s1 + $0xe8] sm:$0xff]
    %v43 = vld [vmem:[%s1 + $0xf0] sm:$0xff]
    %v44 = vld [vmem:[%s1 + $0xf8] sm:$0xff]
    %v47 = vunpack.c.l.s4 1983009808
    %v48 = vunpack.c.0.s8 %v47
    %v49 = vlaneseq
    %v50 = vshrl.u32 %v49, 7
    %v51 = vsub.s32 %v48, %v50
    %v52 = vrot.slane %v12, %v51
    %v53 = vcombine.high %v52, %v52
    %56 = vmatprep.subr.mxu0 0.0
    %57 = vmatpush1.msra.mxu0 %v13
    %58 = vmatprep.subr.mxu0 0.0
    %59 = vmatpush1.msra.mxu0 %v14
    %60 = vmatprep.subr.mxu0 0.0
    %61 = vmatpush1.msra.mxu0 %v15
    %62 = vmatprep.subr.mxu0 0.0
    %63 = vmatpush1.msra.mxu0 %v16
    %64 = vmatprep.subr.mxu0 0.0
    %65 = vmatpush1.msra.mxu0 %v17
    %66 = vmatprep.subr.mxu0 0.0
    %67 = vmatpush1.msra.mxu0 %v18
    %68 = vmatprep.subr.mxu0 0.0
    %69 = vmatpush1.msra.mxu0 %v19
    %70 = vmatprep.subr.mxu0 0.0
    %71 = vmatpush1.msra.mxu0 %v20
    %72 = vmatprep.subr.mxu0 0.0
    %73 = vmatpush1.msra.mxu0 %v21
    %74 = vmatprep.subr.mxu0 0.0
    %75 = vmatpush1.msra.mxu0 %v22
    %76 = vmatprep.subr.mxu0 0.0
    %77 = vmatpush1.msra.mxu0 %v23
    %78 = vmatprep.subr.mxu0 0.0
    %79 = vmatpush1.msra.mxu0 %v24
    %80 = vmatprep.subr.mxu0 0.0
    %81 = vmatpush1.msra.mxu0 %v25
    %82 = vmatprep.subr.mxu0 0.0
    %83 = vmatpush1.msra.mxu0 %v26
    %84 = vmatprep.subr.mxu0 0.0
    %85 = vmatpush1.msra.mxu0 %v27
    %86 = vmatprep.subr.mxu0 0.0
    %87 = vmatpush1.msra.mxu0 %v28
    %88 = vmatprep.subr.mxu0 0.0
    %89 = vmatpush1.msra.mxu0 %v29
    %90 = vmatprep.subr.mxu0 0.0
    %91 = vmatpush1.msra.mxu0 %v30
    %92 = vmatprep.subr.mxu0 0.0
    %93 = vmatpush1.msra.mxu0 %v31
    %94 = vmatprep.subr.mxu0 0.0
    %95 = vmatpush1.msra.mxu0 %v32
    %96 = vmatprep.subr.mxu0 0.0
    %97 = vmatpush1.msra.mxu0 %v33
    %98 = vmatprep.subr.mxu0 0.0
    %99 = vmatpush1.msra.mxu0 %v34
    %100 = vmatprep.subr.mxu0 0.0
    %101 = vmatpush1.msra.mxu0 %v35
    %102 = vmatprep.subr.mxu0 0.0
    %103 = vmatpush1.msra.mxu0 %v36
    %104 = vmatprep.subr.mxu0 0.0
    %105 = vmatpush1.msra.mxu0 %v37
    %106 = vmatprep.subr.mxu0 0.0
    %107 = vmatpush1.msra.mxu0 %v38
    %108 = vmatprep.subr.mxu0 0.0
    %109 = vmatpush1.msra.mxu0 %v39
    %110 = vmatprep.subr.mxu0 0.0
    %111 = vmatpush1.msra.mxu0 %v40
    %112 = vmatprep.subr.mxu0 0.0
    %113 = vmatpush1.msra.mxu0 %v41
    %114 = vmatprep.subr.mxu0 0.0
    %115 = vmatpush1.msra.mxu0 %v42
    %116 = vmatprep.subr.mxu0 0.0
    %117 = vmatpush1.msra.mxu0 %v43
    %118 = vmatprep.subr.mxu0 0.0
    %119 = vmatpush1.msra.mxu0 %v44
    %120 = vmatprep.mubr.f32.mxu0 %v53
    %121 = vmatmul.mubr.f32.gmra.mrb[0].mxu0 %v52
    %v122 = vpop.f32.mrb[0].mxu0
    %v123 = vadd.f32 0.0, %v122
    %v124 = vpop.f32.mrb[0].mxu0
    %125 = vdwg.mxu0
    %v126 = vmul.f32 %v12, %v12
    %v129 = vunpack.c.l.s4 1983009808
    %v130 = vunpack.c.0.s8 %v129
    %v131 = vlaneseq
    %v132 = vshrl.u32 %v131, 7
    %v133 = vsub.s32 %v130, %v132
    %v134 = vrot.slane %v126, %v133
    %v135 = vcombine.high %v134, %v134
    %138 = vmatprep.subr.mxu0 0.0
    %139 = vmatpush1.msra.mxu0 %v13
    %140 = vmatprep.subr.mxu0 0.0
    %141 = vmatpush1.msra.mxu0 %v14
    %142 = vmatprep.subr.mxu0 0.0
    %143 = vmatpush1.msra.mxu0 %v15
    %144 = vmatprep.subr.mxu0 0.0
    %145 = vmatpush1.msra.mxu0 %v16
    %146 = vmatprep.subr.mxu0 0.0
    %147 = vmatpush1.msra.mxu0 %v17
    %148 = vmatprep.subr.mxu0 0.0
    %149 = vmatpush1.msra.mxu0 %v18
    %150 = vmatprep.subr.mxu0 0.0
    %151 = vmatpush1.msra.mxu0 %v19
    %152 = vmatprep.subr.mxu0 0.0
    %153 = vmatpush1.msra.mxu0 %v20
    %154 = vmatprep.subr.mxu0 0.0
    %155 = vmatpush1.msra.mxu0 %v21
    %156 = vmatprep.subr.mxu0 0.0
    %157 = vmatpush1.msra.mxu0 %v22
    %158 = vmatprep.subr.mxu0 0.0
    %159 = vmatpush1.msra.mxu0 %v23
    %160 = vmatprep.subr.mxu0 0.0
    %161 = vmatpush1.msra.mxu0 %v24
    %162 = vmatprep.subr.mxu0 0.0
    %163 = vmatpush1.msra.mxu0 %v25
    %164 = vmatprep.subr.mxu0 0.0
    %165 = vmatpush1.msra.mxu0 %v26
    %166 = vmatprep.subr.mxu0 0.0
    %167 = vmatpush1.msra.mxu0 %v27
    %168 = vmatprep.subr.mxu0 0.0
    %169 = vmatpush1.msra.mxu0 %v28
    %170 = vmatprep.subr.mxu0 0.0
    %171 = vmatpush1.msra.mxu0 %v29
    %172 = vmatprep.subr.mxu0 0.0
    %173 = vmatpush1.msra.mxu0 %v30
    %174 = vmatprep.subr.mxu0 0.0
    %175 = vmatpush1.msra.mxu0 %v31
    %176 = vmatprep.subr.mxu0 0.0
    %177 = vmatpush1.msra.mxu0 %v32
    %178 = vmatprep.subr.mxu0 0.0
    %179 = vmatpush1.msra.mxu0 %v33
    %180 = vmatprep.subr.mxu0 0.0
    %181 = vmatpush1.msra.mxu0 %v34
    %182 = vmatprep.subr.mxu0 0.0
    %183 = vmatpush1.msra.mxu0 %v35
    %184 = vmatprep.subr.mxu0 0.0
    %185 = vmatpush1.msra.mxu0 %v36
    %186 = vmatprep.subr.mxu0 0.0
    %187 = vmatpush1.msra.mxu0 %v37
    %188 = vmatprep.subr.mxu0 0.0
    %189 = vmatpush1.msra.mxu0 %v38
    %190 = vmatprep.subr.mxu0 0.0
    %191 = vmatpush1.msra.mxu0 %v39
    %192 = vmatprep.subr.mxu0 0.0
    %193 = vmatpush1.msra.mxu0 %v40
    %194 = vmatprep.subr.mxu0 0.0
    %195 = vmatpush1.msra.mxu0 %v41
    %196 = vmatprep.subr.mxu0 0.0
    %197 = vmatpush1.msra.mxu0 %v42
    %198 = vmatprep.subr.mxu0 0.0
    %199 = vmatpush1.msra.mxu0 %v43
    %200 = vmatprep.subr.mxu0 0.0
    %201 = vmatpush1.msra.mxu0 %v44
    %202 = vmatprep.mubr.f32.mxu0 %v135
    %203 = vmatmul.mubr.f32.gmra.mrb[0].mxu0 %v134
    %v204 = vpop.f32.mrb[0].mxu0
    %v205 = vadd.f32 0.0, %v204
    %v206 = vpop.f32.mrb[0].mxu0
    %207 = vdwg.mxu0
    %v208 = vmax.f32 %v205, 1e-16
    %v209 = vrsqrt.pop %v208
    %v210 = vmul.f32 %v209, 0.17677669
    %v211 = vmul.f32 %v123, %v210
    %vm212 = vcmask 254976
    %213 = vst.msk [vmem:[#allocation2] sm:$0x3] %vm212, %v211
    // Predicated region
    $region10: #{tpu_custom_call.1} parent=1 // pred_check
      _
    $region11: #{tpu_custom_call.1} parent=1 // pred_check_branch
      %215 = sbr.rel (0) target = $region13
    $region12: #{tpu_custom_call.1} parent=1 // pred_region
      %s217 = ssub.s32 32, 32
      %218 = vsyncadd [#allocation3], %s217
      %s220 = sshll.u32 [#allocation2], 4
      %s221 = int_to_ptr.vmem [resolvable:$true] %s220
      %223 = dma.vmem_to_hbm [thread:$0]  %s221, 32, %s2, [#allocation3]
    $region13: #{tpu_custom_call.1} parent=1 // pred_fallthru
      _
    // Predicated region
    $region14: #{tpu_custom_call.1} parent=1 // pred_check
      _
    $region15: #{tpu_custom_call.1} parent=1 // pred_check_branch
      %225 = sbr.rel (0) target = $region17
    $region16: #{tpu_custom_call.1} parent=1 // pred_region
      %226 = dma.done [#allocation3], 32
    $region17: #{tpu_custom_call.1} parent=1 // pred_fallthru
      _
    %227 = vsyncpa [#allocation3], 1

</llo_original>
